<compile_context>
chip_gen: v5e
topology: v5e:2x2
jax: 0.10.0
libtpu: 0.0.40
codegen_flags: <defaults>
</compile_context>

<pallas_src>
import functools

import jax
import jax.numpy as jnp
from jax.experimental import pallas as pl
from jax.experimental.pallas import tpu as pltpu

GAMMA = 0.99
EPSILON = 1e-8
CLIP_RANGE = 10.0
VAR_EMA_OLD = 0.99   # module hard-codes: var = var*0.99 + returns.var()*0.01
VAR_EMA_NEW = 0.01


def _vmem_caps():
    """(tiling/residency budget, scoped-VMEM limit to request) in bytes."""
    try:
        phys = int(pltpu.get_tpu_info().vmem_capacity_bytes)
    except Exception:                       # conservative default: v7x per-TC VMEM
        phys = 64 * 1024 * 1024
    budget = min(phys // 2, 48 * 1024 * 1024)
    limit = max(32 * 1024 * 1024, min(phys - 8 * 1024 * 1024, 100 * 1024 * 1024))
    return budget, int(limit)


def _pick_block_t(T, B, budget_bytes):
    """Largest 8-aligned time chunk keeping ~12 live chunk temporaries in budget."""
    max_bt = max(8, (budget_bytes // 3) // (12 * B * 4))
    max_bt = int(min(max_bt, 1024))
    if T <= max_bt:
        return T
    if T % 8 == 0:
        bt = (max_bt // 8) * 8
        while bt >= 8 and T % bt != 0:
            bt -= 8
        if bt >= 8:
            return bt
    # No aligned divisor: use an aligned chunk and mask the ragged tail in-kernel
    # (never fall back to a monolithic bt = T block that blows scoped VMEM).
    return (max_bt // 8) * 8


def _fused_fits(T, B, bt, budget_bytes):
    tile = bt * B * 4
    est = 12 * tile                 # double-buffered inputs + scan temporaries
    est += 2 * T * B * 4            # resident normalized-output block (conservative)
    est += 32 * B * 4 + (1 << 16)   # carry / stat buffers + slack
    return est <= budget_bytes


def _scan_norm_kernel(rew_ref, done_ref, ret_ref, var_ref, *refs,
                      gamma, epsilon, clip_range, total_t, block_t,
                      fused, ragged):
    if fused:
        (out_ref, new_ret_ref, new_var_ref,
         cur_ref, sum_ref, sumsq_ref, shift_ref) = refs
    else:
        out_ref = None
        (new_ret_ref, new_var_ref,
         cur_ref, sum_ref, sumsq_ref, shift_ref) = refs

    i = pl.program_id(0)
    nc = pl.num_programs(0)
    bt, B = rew_ref.shape

    @pl.when(i == 0)
    def _init():
        cur_ref[...] = ret_ref[...]
        sum_ref[...] = jnp.zeros_like(sum_ref)
        sumsq_ref[...] = jnp.zeros_like(sumsq_ref)

    r = rew_ref[...].astype(jnp.float32)
    a = gamma * (1.0 - done_ref[...].astype(jnp.float32))

    if ragged:
        # Only the latest-time chunk (grid step 0) can be ragged: mask its
        # padded tail rows to the affine identity (a=1, r=0).
        row0 = (nc - 1 - i) * block_t
        row = row0 + jax.lax.broadcasted_iota(jnp.int32, (bt, B), 0)
        valid = row < total_t
        r = jnp.where(valid, r, 0.0)
        a = jnp.where(valid, a, 1.0)

    # ---- log-depth suffix composition of the row-affine maps ----------------
    # f_t(x) = r_t + a_t * x.  After the scan, A[t] = prod_{j>=t} a_j and C[t]
    # is the backward return assuming zero incoming carry, so every row's
    # return is A[t]*carry_in + C[t] in ONE broadcast mul-add: the serial
    # dependency is two vector ops per chunk instead of two per row.
    A, C = a, r
    d = 1
    while d < bt:
        A_nxt = jnp.concatenate(
            [A[d:, :], jnp.full((d, B), 1.0, dtype=jnp.float32)], axis=0)
        C_nxt = jnp.concatenate(
            [C[d:, :], jnp.zeros((d, B), dtype=jnp.float32)], axis=0)
        C = C + A * C_nxt          # uses the pre-update A
        A = A * A_nxt
        d *= 2

    cur_in = cur_ref[...]                 # (1, B) carry from the later-time chunk
    returns = A * cur_in + C              # (bt, B): every return of this chunk
    cur_out = returns[0:1, :]             # earliest row -> carry for next chunk
    cur_ref[...] = cur_out
    new_ret_ref[...] = cur_out            # cheap resident write every step

    # ---- single-pass, shift-conditioned per-lane statistics ------------------
    @pl.when(i == 0)
    def _capture_shift():
        shift_ref[...] = jnp.mean(returns, axis=0, keepdims=True)

    y = returns - shift_ref[...]
    if ragged:
        y = jnp.where(valid, y, 0.0)
    sum_ref[...] += jnp.sum(y, axis=0, keepdims=True)
    sumsq_ref[...] += jnp.sum(y * y, axis=0, keepdims=True)

    if fused:
        # Stash the raw rewards chunk in the resident output block so the final
        # normalize sweep never re-reads HBM (drops the whole second pass).
        row_off = pl.multiple_of((nc - 1 - i) * block_t, 8)
        out_ref[pl.ds(row_off, block_t), :] = rew_ref[...]

    @pl.when(i == nc - 1)
    def _finalize():
        # Per-lane (count, shifted sum, shifted sum-of-squares) -> Chan merge.
        n_t = float(total_t)
        n_all = float(total_t * B)
        s = sum_ref[...]
        ss = sumsq_ref[...]
        mean_lane = shift_ref[...] + s / n_t
        m2_lane = ss - s * s / n_t
        grand_mean = jnp.sum(mean_lane) / B
        dm = mean_lane - grand_mean
        var_sample = (jnp.sum(m2_lane) + n_t * jnp.sum(dm * dm)) / (n_all - 1.0)
        new_var = var_ref[0] * VAR_EMA_OLD + var_sample * VAR_EMA_NEW
        new_var_ref[0] = new_var

        if fused:
            inv = jax.lax.rsqrt(new_var + epsilon)

            def _norm(j, carry):
                off = pl.multiple_of(j * block_t, 8)
                blk = out_ref[pl.ds(off, block_t), :]
                out_ref[pl.ds(off, block_t), :] = jnp.clip(
                    blk * inv, -clip_range, clip_range)
                return carry

            jax.lax.fori_loop(0, total_t // block_t, _norm, 0)


def _normalize_kernel(rew_ref, var_ref, out_ref, *, epsilon, clip_range):
    inv = jax.lax.rsqrt(var_ref[0] + epsilon)     # EUP rsqrt, off the VALU slot
    out_ref[...] = jnp.clip(rew_ref[...] * inv, -clip_range, clip_range)


def reward_normalizer_forward(rewards, dones, return_, var,
                              gamma=GAMMA, epsilon=EPSILON,
                              clip_range=CLIP_RANGE, block_t=None, fuse=None):
    """Training-mode forward: returns (normalized_rewards, new_return, new_var)."""
    rewards = jnp.asarray(rewards, jnp.float32)
    dones = jnp.asarray(dones, jnp.float32)
    T, B = rewards.shape
    assert T * B > 1, "unbiased variance (torch .var()) needs more than one element"

    # return_ may be the fresh zeros(1) buffer or a per-column carry from a
    # previous call; var is the running scalar variance.
    ret0 = jnp.broadcast_to(
        jnp.asarray(return_, jnp.float32).reshape(-1), (B,)).reshape(1, B)
    var0 = jnp.asarray(var, jnp.float32).reshape(-1)[:1]

    budget, vmem_limit = _vmem_caps()
    bt = block_t if block_t is not None else _pick_block_t(T, B, budget)
    bt = int(min(bt, T))
    if bt != T and bt % 8 != 0:
        raise ValueError("block_t must be a multiple of 8 (or the full time extent)")
    nc = pl.cdiv(T, bt)
    ragged = (T % bt) != 0
    fused = (not ragged) and _fused_fits(T, B, bt, budget)
    if fuse is not None:
        fused = fused and bool(fuse)

    smem_spec = pl.BlockSpec((1,), lambda i: (0,),
                             memory_space=pltpu.MemorySpace.SMEM)
    chunk_spec = pl.BlockSpec((bt, B), lambda i: (nc - 1 - i, 0))   # reverse time

    kernel = functools.partial(
        _scan_norm_kernel, gamma=gamma, epsilon=epsilon, clip_range=clip_range,
        total_t=T, block_t=bt, fused=fused, ragged=ragged)

    out_shape = [jax.ShapeDtypeStruct((1, B), jnp.float32),     # new return carry
                 jax.ShapeDtypeStruct((1,), jnp.float32)]       # new running var
    out_specs = [pl.BlockSpec((1, B), lambda i: (0, 0)), smem_spec]
    if fused:
        out_shape = [jax.ShapeDtypeStruct((T, B), jnp.float32)] + out_shape
        out_specs = [pl.BlockSpec((T, B), lambda i: (0, 0))] + out_specs

    results = pl.pallas_call(
        kernel,
        out_shape=tuple(out_shape),
        grid=(nc,),
        in_specs=[chunk_spec,                                    # rewards
                  chunk_spec,                                    # dones
                  pl.BlockSpec((1, B), lambda i: (0, 0)),        # initial return
                  smem_spec],                                    # running var
        out_specs=tuple(out_specs),
        scratch_shapes=[pltpu.VMEM((1, B), jnp.float32),         # carry
                        pltpu.VMEM((1, B), jnp.float32),         # shifted sum
                        pltpu.VMEM((1, B), jnp.float32),         # shifted sum-sq
                        pltpu.VMEM((1, B), jnp.float32)],        # conditioning shift
        compiler_params=pltpu.CompilerParams(
            dimension_semantics=("arbitrary",),
            vmem_limit_bytes=vmem_limit),
    )(rewards, dones, ret0, var0)

    if fused:
        normalized, new_ret, new_var = results
        return normalized, new_ret, new_var

    new_ret, new_var = results

    # ---- fallback streaming normalize (rewards not VMEM-resident) -----------
    bt2 = int(min(T, max(8, ((budget // (6 * B * 4)) // 8) * 8)))
    norm_kernel = functools.partial(_normalize_kernel, epsilon=epsilon,
                                    clip_range=clip_range)
    normalized = pl.pallas_call(
        norm_kernel,
        out_shape=jax.ShapeDtypeStruct((T, B), jnp.float32),
        grid=(pl.cdiv(T, bt2),),
        in_specs=[pl.BlockSpec((bt2, B), lambda i: (i, 0)), smem_spec],
        out_specs=pl.BlockSpec((bt2, B), lambda i: (i, 0)),
        compiler_params=pltpu.CompilerParams(
            dimension_semantics=("parallel",),    # megacore-shardable on v7x
            vmem_limit_bytes=vmem_limit),
    )(rewards, new_var)
    return normalized, new_ret, new_var


def _reference_forward(rewards, dones, return_, var,
                       gamma=GAMMA, epsilon=EPSILON, clip_range=CLIP_RANGE):
    """Pure-JAX mirror of the PyTorch forward (training mode)."""
    T, B = rewards.shape
    cur = jnp.broadcast_to(jnp.asarray(return_, jnp.float32).reshape(-1), (B,))
    rets = []
    for i in reversed(range(T)):
        cur = rewards[i] + gamma * cur * (1.0 - dones[i])
        rets.append(cur)
    returns = jnp.stack(rets[::-1], axis=0)
    n = returns.size
    m = returns.mean()
    var_sample = jnp.sum((returns - m) ** 2) / (n - 1)       # torch .var(): unbiased
    new_var = (jnp.asarray(var, jnp.float32).reshape(-1)[0] * VAR_EMA_OLD
               + var_sample * VAR_EMA_NEW)
    normalized = jnp.clip(rewards / jnp.sqrt(new_var + epsilon),
                          -clip_range, clip_range)
    return normalized, cur, new_var


if __name__ == "__main__":
    base_key = jax.random.PRNGKey(0)

    def make_inputs(T, B, tag):
        k1, k2 = jax.random.split(jax.random.fold_in(base_key, tag))
        rewards = jax.random.normal(k1, (T, B), dtype=jnp.float32) + 0.5
        dones = (jax.random.uniform(k2, (T, B)) < 0.2).astype(jnp.float32)
        return rewards, dones

    def check(T, B, block_t=None, fuse=None, tag=0):
        rewards, dones = make_inputs(T, B, tag)
        return_buf = jnp.zeros((1,), dtype=jnp.float32)   # as registered in __init__
        var_buf = jnp.ones((1,), dtype=jnp.float32)

        out, new_ret, new_var = reward_normalizer_forward(
            rewards, dones, return_buf, var_buf, block_t=block_t, fuse=fuse)
        jax.block_until_ready((out, new_ret, new_var))

        ref_out, ref_ret, ref_var = _reference_forward(
            rewards, dones, return_buf, var_buf)
        assert jnp.allclose(out, ref_out, rtol=1e-4, atol=1e-5), (T, B, block_t, fuse)
        assert jnp.allclose(new_ret[0], ref_ret, rtol=1e-4, atol=1e-5), (T, B, block_t)
        assert jnp.allclose(new_var[0], ref_var, rtol=1e-4, atol=1e-5), (T, B, block_t)

    # single chunk, fused normalize (module-consistent tiny shape)
    check(8, 128, tag=1)
    # multi-chunk fused path: cross-chunk carry + resident-output stash
    check(32, 128, block_t=8, tag=2)
    check(48, 128, block_t=16, tag=3)
    # explicit two-pass fallback (streaming normalize kernel)
    check(32, 128, block_t=8, fuse=False, tag=4)
    # ragged tail (T not divisible by chunk): in-kernel masking path
    check(20, 128, block_t=8, tag=5)

    # stateful chaining: feed the updated (per-column) return / var back in
    T, B = 16, 128
    r1, d1 = make_inputs(T, B, 10)
    r2, d2 = make_inputs(T, B, 11)
    ret_buf = jnp.zeros((1,), dtype=jnp.float32)
    var_buf = jnp.ones((1,), dtype=jnp.float32)
    o1, ret1, var1 = reward_normalizer_forward(r1, d1, ret_buf, var_buf, block_t=8)
    o2, ret2, var2 = reward_normalizer_forward(r2, d2, ret1, var1, block_t=8)
    jax.block_until_ready((o2, ret2, var2))
    ro1, rr1, rv1 = _reference_forward(r1, d1, ret_buf, var_buf)
    ro2, rr2, rv2 = _reference_forward(r2, d2, rr1, rv1)
    assert jnp.allclose(o1, ro1, rtol=1e-4, atol=1e-5)
    assert jnp.allclose(o2, ro2, rtol=1e-4, atol=1e-5)
    assert jnp.allclose(ret2[0], rr2, rtol=1e-4, atol=1e-5)
    assert jnp.allclose(var2[0], rv2, rtol=1e-4, atol=1e-5)

    print("KERNEL_OK")
</pallas_src>

<mosaic_0001>
module attributes {stable_mosaic.version = 11 : i64} {
  func.func @_scan_norm_kernel(%arg0: i32, %arg1: memref<8x128xf32, #tpu.memory_space<vmem>>, %arg2: memref<8x128xf32, #tpu.memory_space<vmem>>, %arg3: memref<1x128xf32, #tpu.memory_space<vmem>>, %arg4: memref<1xf32, #tpu.memory_space<smem>>, %arg5: memref<8x128xf32, #tpu.memory_space<vmem>>, %arg6: memref<1x128xf32, #tpu.memory_space<vmem>>, %arg7: memref<1xf32, #tpu.memory_space<smem>>, %arg8: memref<1x128xf32, #tpu.memory_space<vmem>>, %arg9: memref<1x128xf32, #tpu.memory_space<vmem>>, %arg10: memref<1x128xf32, #tpu.memory_space<vmem>>, %arg11: memref<1x128xf32, #tpu.memory_space<vmem>>) attributes {dimension_semantics = [#tpu.dimension_semantics<arbitrary>], iteration_bounds = array<i64: 1>, scalar_prefetch = 0 : i64, scratch_operands = 4 : i64, tpu.core_type = #tpu.core_type<tc>, window_params = [{transform_indices = @transform_0, window_bounds = array<i64: 8, 128>}, {transform_indices = @transform_1, window_bounds = array<i64: 8, 128>}, {pipeline_mode = #tpu.pipeline_mode<synchronous>, transform_indices = @transform_2, window_bounds = array<i64: 1, 128>}, {transform_indices = @transform_3, window_bounds = array<i64: 1>}, {pipeline_mode = #tpu.pipeline_mode<synchronous>, transform_indices = @transform_4, window_bounds = array<i64: 8, 128>}, {pipeline_mode = #tpu.pipeline_mode<synchronous>, transform_indices = @transform_5, window_bounds = array<i64: 1, 128>}, {transform_indices = @transform_6, window_bounds = array<i64: 1>}]} {
    %c0_i32 = arith.constant 0 : i32
    %0 = arith.cmpi eq, %arg0, %c0_i32 : i32
    %1 = arith.extui %0 : i1 to i32
    %c0_i32_0 = arith.constant 0 : i32
    %2 = arith.cmpi ne, %1, %c0_i32_0 : i32
    scf.if %2 {
      %c0_37 = arith.constant 0 : index
      %c0_38 = arith.constant 0 : index
      %69 = vector.load %arg3[%c0_37, %c0_38] : memref<1x128xf32, #tpu.memory_space<vmem>>, vector<1x128xf32>
      %c0_39 = arith.constant 0 : index
      %c0_40 = arith.constant 0 : index
      %70 = vector.load %arg8[%c0_39, %c0_40] : memref<1x128xf32, #tpu.memory_space<vmem>>, vector<1x128xf32>
      tpu.vector_store %arg8[%c0_39, %c0_40], %69 {strides = array<i32>} : memref<1x128xf32, #tpu.memory_space<vmem>>, vector<1x128xf32>,
      %cst_41 = arith.constant 0.000000e+00 : f32
      %71 = vector.broadcast %cst_41 : f32 to vector<1x128xf32>
      %c0_42 = arith.constant 0 : index
      %c0_43 = arith.constant 0 : index
      %72 = vector.load %arg9[%c0_42, %c0_43] : memref<1x128xf32, #tpu.memory_space<vmem>>, vector<1x128xf32>
      tpu.vector_store %arg9[%c0_42, %c0_43], %71 {strides = array<i32>} : memref<1x128xf32, #tpu.memory_space<vmem>>, vector<1x128xf32>,
      %cst_44 = arith.constant 0.000000e+00 : f32
      %73 = vector.broadcast %cst_44 : f32 to vector<1x128xf32>
      %c0_45 = arith.constant 0 : index
      %c0_46 = arith.constant 0 : index
      %74 = vector.load %arg10[%c0_45, %c0_46] : memref<1x128xf32, #tpu.memory_space<vmem>>, vector<1x128xf32>
      tpu.vector_store %arg10[%c0_45, %c0_46], %73 {strides = array<i32>} : memref<1x128xf32, #tpu.memory_space<vmem>>, vector<1x128xf32>,
    } else {
    }
    %c0 = arith.constant 0 : index
    %c0_1 = arith.constant 0 : index
    %3 = vector.load %arg1[%c0, %c0_1] : memref<8x128xf32, #tpu.memory_space<vmem>>, vector<8x128xf32>
    %c0_2 = arith.constant 0 : index
    %c0_3 = arith.constant 0 : index
    %4 = vector.load %arg2[%c0_2, %c0_3] : memref<8x128xf32, #tpu.memory_space<vmem>>, vector<8x128xf32>
    %cst = arith.constant 1.000000e+00 : f32
    %5 = vector.broadcast %cst : f32 to vector<8x128xf32>
    %6 = arith.subf %5, %4 : vector<8x128xf32>
    %cst_4 = arith.constant 9.900000e-01 : f32
    %7 = vector.broadcast %cst_4 : f32 to vector<8x128xf32>
    %8 = arith.mulf %7, %6 : vector<8x128xf32>
    %9 = vector.extract_strided_slice %8 {offsets = [1, 0], sizes = [7, 128], strides = [1, 1]} : vector<8x128xf32> to vector<7x128xf32>
    %cst_5 = arith.constant 1.000000e+00 : f32
    %10 = vector.broadcast %cst_5 : f32 to vector<1x128xf32>
    %11 = tpu.concatenate %9, %10 in 0 : vector<7x128xf32>, vector<1x128xf32> -> vector<8x128xf32>
    %12 = vector.extract_strided_slice %3 {offsets = [1, 0], sizes = [7, 128], strides = [1, 1]} : vector<8x128xf32> to vector<7x128xf32>
    %cst_6 = arith.constant 0.000000e+00 : f32
    %13 = vector.broadcast %cst_6 : f32 to vector<1x128xf32>
    %14 = tpu.concatenate %12, %13 in 0 : vector<7x128xf32>, vector<1x128xf32> -> vector<8x128xf32>
    %15 = arith.mulf %8, %14 : vector<8x128xf32>
    %16 = arith.addf %3, %15 : vector<8x128xf32>
    %17 = arith.mulf %8, %11 : vector<8x128xf32>
    %18 = vector.extract_strided_slice %17 {offsets = [2, 0], sizes = [6, 128], strides = [1, 1]} : vector<8x128xf32> to vector<6x128xf32>
    %cst_7 = arith.constant 1.000000e+00 : f32
    %19 = vector.broadcast %cst_7 : f32 to vector<2x128xf32>
    %20 = tpu.concatenate %18, %19 in 0 : vector<6x128xf32>, vector<2x128xf32> -> vector<8x128xf32>
    %21 = vector.extract_strided_slice %16 {offsets = [2, 0], sizes = [6, 128], strides = [1, 1]} : vector<8x128xf32> to vector<6x128xf32>
    %cst_8 = arith.constant 0.000000e+00 : f32
    %22 = vector.broadcast %cst_8 : f32 to vector<2x128xf32>
    %23 = tpu.concatenate %21, %22 in 0 : vector<6x128xf32>, vector<2x128xf32> -> vector<8x128xf32>
    %24 = arith.mulf %17, %23 : vector<8x128xf32>
    %25 = arith.addf %16, %24 : vector<8x128xf32>
    %26 = arith.mulf %17, %20 : vector<8x128xf32>
    %27 = vector.extract_strided_slice %26 {offsets = [4, 0], sizes = [4, 128], strides = [1, 1]} : vector<8x128xf32> to vector<4x128xf32>
    %cst_9 = arith.constant 1.000000e+00 : f32
    %28 = vector.broadcast %cst_9 : f32 to vector<4x128xf32>
    %29 = tpu.concatenate %27, %28 in 0 : vector<4x128xf32>, vector<4x128xf32> -> vector<8x128xf32>
    %30 = vector.extract_strided_slice %25 {offsets = [4, 0], sizes = [4, 128], strides = [1, 1]} : vector<8x128xf32> to vector<4x128xf32>
    %cst_10 = arith.constant 0.000000e+00 : f32
    %31 = vector.broadcast %cst_10 : f32 to vector<4x128xf32>
    %32 = tpu.concatenate %30, %31 in 0 : vector<4x128xf32>, vector<4x128xf32> -> vector<8x128xf32>
    %33 = arith.mulf %26, %32 : vector<8x128xf32>
    %34 = arith.addf %25, %33 : vector<8x128xf32>
    %35 = arith.mulf %26, %29 : vector<8x128xf32>
    %c0_11 = arith.constant 0 : index
    %c0_12 = arith.constant 0 : index
    %36 = vector.load %arg8[%c0_11, %c0_12] : memref<1x128xf32, #tpu.memory_space<vmem>>, vector<1x128xf32>
    %37 = vector.broadcast %36 : vector<1x128xf32> to vector<8x128xf32>
    %38 = arith.mulf %35, %37 : vector<8x128xf32>
    %39 = arith.addf %38, %34 : vector<8x128xf32>
    %40 = vector.extract_strided_slice %39 {offsets = [0, 0], sizes = [1, 128], strides = [1, 1]} : vector<8x128xf32> to vector<1x128xf32>
    %c0_13 = arith.constant 0 : index
    %c0_14 = arith.constant 0 : index
    %41 = vector.load %arg8[%c0_13, %c0_14] : memref<1x128xf32, #tpu.memory_space<vmem>>, vector<1x128xf32>
    tpu.vector_store %arg8[%c0_13, %c0_14], %40 {strides = array<i32>} : memref<1x128xf32, #tpu.memory_space<vmem>>, vector<1x128xf32>,
    %c0_15 = arith.constant 0 : index
    %c0_16 = arith.constant 0 : index
    %42 = vector.load %arg6[%c0_15, %c0_16] : memref<1x128xf32, #tpu.memory_space<vmem>>, vector<1x128xf32>
    tpu.vector_store %arg6[%c0_15, %c0_16], %40 {strides = array<i32>} : memref<1x128xf32, #tpu.memory_space<vmem>>, vector<1x128xf32>,
    %c0_i32_17 = arith.constant 0 : i32
    %43 = arith.cmpi eq, %arg0, %c0_i32_17 : i32
    %44 = arith.extui %43 : i1 to i32
    %c0_i32_18 = arith.constant 0 : i32
    %45 = arith.cmpi ne, %44, %c0_i32_18 : i32
    scf.if %45 {
      %cst_37 = arith.constant dense<0.000000e+00> : vector<128xf32>
      %69 = vector.multi_reduction <add>, %39, %cst_37 [0] : vector<8x128xf32> to vector<128xf32>
      %70 = vector.shape_cast %69 : vector<128xf32> to vector<1x128xf32>
      %cst_38 = arith.constant 8.000000e+00 : f32
      %71 = vector.broadcast %cst_38 : f32 to vector<1x128xf32>
      %72 = arith.divf %70, %71 : vector<1x128xf32>
      %c0_39 = arith.constant 0 : index
      %c0_40 = arith.constant 0 : index
      %73 = vector.load %arg11[%c0_39, %c0_40] : memref<1x128xf32, #tpu.memory_space<vmem>>, vector<1x128xf32>
      tpu.vector_store %arg11[%c0_39, %c0_40], %72 {strides = array<i32>} : memref<1x128xf32, #tpu.memory_space<vmem>>, vector<1x128xf32>,
    } else {
    }
    %c0_19 = arith.constant 0 : index
    %c0_20 = arith.constant 0 : index
    %46 = vector.load %arg11[%c0_19, %c0_20] : memref<1x128xf32, #tpu.memory_space<vmem>>, vector<1x128xf32>
    %47 = vector.broadcast %46 : vector<1x128xf32> to vector<8x128xf32>
    %48 = arith.subf %39, %47 : vector<8x128xf32>
    %c0_21 = arith.constant 0 : index
    %c0_22 = arith.constant 0 : index
    %49 = vector.load %arg9[%c0_21, %c0_22] : memref<1x128xf32, #tpu.memory_space<vmem>>, vector<1x128xf32>
    %cst_23 = arith.constant dense<0.000000e+00> : vector<128xf32>
    %50 = vector.multi_reduction <add>, %48, %cst_23 [0] : vector<8x128xf32> to vector<128xf32>
    %51 = vector.shape_cast %50 : vector<128xf32> to vector<1x128xf32>
    %52 = arith.addf %49, %51 : vector<1x128xf32>
    %c0_24 = arith.constant 0 : index
    %c0_25 = arith.constant 0 : index
    %53 = vector.load %arg9[%c0_24, %c0_25] : memref<1x128xf32, #tpu.memory_space<vmem>>, vector<1x128xf32>
    tpu.vector_store %arg9[%c0_24, %c0_25], %52 {strides = array<i32>} : memref<1x128xf32, #tpu.memory_space<vmem>>, vector<1x128xf32>,
    %c0_26 = arith.constant 0 : index
    %c0_27 = arith.constant 0 : index
    %54 = vector.load %arg10[%c0_26, %c0_27] : memref<1x128xf32, #tpu.memory_space<vmem>>, vector<1x128xf32>
    %55 = arith.mulf %48, %48 : vector<8x128xf32>
    %cst_28 = arith.constant dense<0.000000e+00> : vector<128xf32>
    %56 = vector.multi_reduction <add>, %55, %cst_28 [0] : vector<8x128xf32> to vector<128xf32>
    %57 = vector.shape_cast %56 : vector<128xf32> to vector<1x128xf32>
    %58 = arith.addf %54, %57 : vector<1x128xf32>
    %c0_29 = arith.constant 0 : index
    %c0_30 = arith.constant 0 : index
    %59 = vector.load %arg10[%c0_29, %c0_30] : memref<1x128xf32, #tpu.memory_space<vmem>>, vector<1x128xf32>
    tpu.vector_store %arg10[%c0_29, %c0_30], %58 {strides = array<i32>} : memref<1x128xf32, #tpu.memory_space<vmem>>, vector<1x128xf32>,
    %c0_i32_31 = arith.constant 0 : i32
    %60 = arith.subi %c0_i32_31, %arg0 : i32
    %c8_i32 = arith.constant 8 : i32
    %61 = arith.muli %60, %c8_i32 : i32
    %62 = tpu.assume_multiple %61, 8 : i32
    %c0_32 = arith.constant 0 : index
    %c0_33 = arith.constant 0 : index
    %63 = vector.load %arg1[%c0_32, %c0_33] : memref<8x128xf32, #tpu.memory_space<vmem>>, vector<8x128xf32>
    %64 = arith.index_cast %62 : i32 to index
    %c0_34 = arith.constant 0 : index
    %65 = vector.load %arg5[%64, %c0_34] : memref<8x128xf32, #tpu.memory_space<vmem>>, vector<8x128xf32>
    tpu.vector_store %arg5[%64, %c0_34], %63 {strides = array<i32>} : memref<8x128xf32, #tpu.memory_space<vmem>>, vector<8x128xf32>,
    %c0_i32_35 = arith.constant 0 : i32
    %66 = arith.cmpi eq, %arg0, %c0_i32_35 : i32
    %67 = arith.extui %66 : i1 to i32
    %c0_i32_36 = arith.constant 0 : i32
    %68 = arith.cmpi ne, %67, %c0_i32_36 : i32
    scf.if %68 {
      %c0_37 = arith.constant 0 : index
      %c0_38 = arith.constant 0 : index
      %69 = vector.load %arg9[%c0_37, %c0_38] : memref<1x128xf32, #tpu.memory_space<vmem>>, vector<1x128xf32>
      %c0_39 = arith.constant 0 : index
      %c0_40 = arith.constant 0 : index
      %70 = vector.load %arg10[%c0_39, %c0_40] : memref<1x128xf32, #tpu.memory_space<vmem>>, vector<1x128xf32>
      %c0_41 = arith.constant 0 : index
      %c0_42 = arith.constant 0 : index
      %71 = vector.load %arg11[%c0_41, %c0_42] : memref<1x128xf32, #tpu.memory_space<vmem>>, vector<1x128xf32>
      %cst_43 = arith.constant 8.000000e+00 : f32
      %72 = vector.broadcast %cst_43 : f32 to vector<1x128xf32>
      %73 = arith.divf %69, %72 : vector<1x128xf32>
      %74 = arith.addf %71, %73 : vector<1x128xf32>
      %75 = arith.mulf %69, %69 : vector<1x128xf32>
      %cst_44 = arith.constant 8.000000e+00 : f32
      %76 = vector.broadcast %cst_44 : f32 to vector<1x128xf32>
      %77 = arith.divf %75, %76 : vector<1x128xf32>
      %78 = arith.subf %70, %77 : vector<1x128xf32>
      %79 = vector.shape_cast %74 : vector<1x128xf32> to vector<1x1x128xf32>
      %cst_45 = arith.constant dense<0.000000e+00> : vector<1xf32>
      %80 = vector.multi_reduction <add>, %79, %cst_45 [1, 2] : vector<1x1x128xf32> to vector<1xf32>
      %81 = vector.shape_cast %80 : vector<1xf32> to vector<1x1x1xf32>
      %82 = vector.extract %81[0, 0, 0] : f32 from vector<1x1x1xf32>
      %cst_46 = arith.constant 1.280000e+02 : f32
      %83 = arith.divf %82, %cst_46 : f32
      %84 = vector.broadcast %83 : f32 to vector<1x128xf32>
      %85 = arith.subf %74, %84 : vector<1x128xf32>
      %86 = vector.shape_cast %78 : vector<1x128xf32> to vector<1x1x128xf32>
      %cst_47 = arith.constant dense<0.000000e+00> : vector<1xf32>
      %87 = vector.multi_reduction <add>, %86, %cst_47 [1, 2] : vector<1x1x128xf32> to vector<1xf32>
      %88 = vector.shape_cast %87 : vector<1xf32> to vector<1x1x1xf32>
      %89 = vector.extract %88[0, 0, 0] : f32 from vector<1x1x1xf32>
      %90 = arith.mulf %85, %85 : vector<1x128xf32>
      %91 = vector.shape_cast %90 : vector<1x128xf32> to vector<1x1x128xf32>
      %cst_48 = arith.constant dense<0.000000e+00> : vector<1xf32>
      %92 = vector.multi_reduction <add>, %91, %cst_48 [1, 2] : vector<1x1x128xf32> to vector<1xf32>
      %93 = vector.shape_cast %92 : vector<1xf32> to vector<1x1x1xf32>
      %94 = vector.extract %93[0, 0, 0] : f32 from vector<1x1x1xf32>
      %cst_49 = arith.constant 8.000000e+00 : f32
      %95 = arith.mulf %cst_49, %94 : f32
      %96 = arith.addf %89, %95 : f32
      %cst_50 = arith.constant 1.023000e+03 : f32
      %97 = arith.divf %96, %cst_50 : f32
      %c0_51 = arith.constant 0 : index
      %98 = memref.load %arg4[%c0_51] : memref<1xf32, #tpu.memory_space<smem>>
      %cst_52 = arith.constant 9.900000e-01 : f32
      %99 = arith.mulf %98, %cst_52 : f32
      %cst_53 = arith.constant 0.00999999977 : f32
      %100 = arith.mulf %97, %cst_53 : f32
      %101 = arith.addf %99, %100 : f32
      %c0_54 = arith.constant 0 : index
      %102 = memref.load %arg7[%c0_54] : memref<1xf32, #tpu.memory_space<smem>>
      memref.store %101, %arg7[%c0_54] : memref<1xf32, #tpu.memory_space<smem>>
      %cst_55 = arith.constant 9.99999993E-9 : f32
      %103 = arith.addf %101, %cst_55 : f32
      %104 = math.rsqrt %103 : f32
      %c0_i32_56 = arith.constant 0 : i32
      %c8_i32_57 = arith.constant 8 : i32
      %105 = arith.muli %c0_i32_56, %c8_i32_57 : i32
      %106 = tpu.assume_multiple %105, 8 : i32
      %107 = arith.index_cast %106 : i32 to index
      %c0_58 = arith.constant 0 : index
      %108 = vector.load %arg5[%107, %c0_58] : memref<8x128xf32, #tpu.memory_space<vmem>>, vector<8x128xf32>
      %109 = vector.broadcast %104 : f32 to vector<8x128xf32>
      %110 = arith.mulf %108, %109 : vector<8x128xf32>
      %cst_59 = arith.constant -1.000000e+01 : f32
      %cst_60 = arith.constant 1.000000e+01 : f32
      %111 = vector.broadcast %cst_59 : f32 to vector<8x128xf32>
      %112 = arith.maximumf %111, %110 : vector<8x128xf32>
      %113 = vector.broadcast %cst_60 : f32 to vector<8x128xf32>
      %114 = arith.minimumf %113, %112 : vector<8x128xf32>
      %115 = arith.index_cast %106 : i32 to index
      %c0_61 = arith.constant 0 : index
      %116 = vector.load %arg5[%115, %c0_61] : memref<8x128xf32, #tpu.memory_space<vmem>>, vector<8x128xf32>
      tpu.vector_store %arg5[%115, %c0_61], %114 {strides = array<i32>} : memref<8x128xf32, #tpu.memory_space<vmem>>, vector<8x128xf32>,
      %c1_i32 = arith.constant 1 : i32
    } else {
    }
    return
  }
  func.func @transform_0(%arg0: i32) -> (i32, i32) {
    %c0_i32 = arith.constant 0 : i32
    %0 = arith.subi %c0_i32, %arg0 : i32
    %c0_i32_0 = arith.constant 0 : i32
    %c0_i32_1 = arith.constant 0 : i32
    return %0, %c0_i32_0 : i32, i32
  }
  func.func @transform_1(%arg0: i32) -> (i32, i32) {
    %c0_i32 = arith.constant 0 : i32
    %0 = arith.subi %c0_i32, %arg0 : i32
    %c0_i32_0 = arith.constant 0 : i32
    %c0_i32_1 = arith.constant 0 : i32
    return %0, %c0_i32_0 : i32, i32
  }
  func.func @transform_2(%arg0: i32) -> (i32, i32) {
    %c0_i32 = arith.constant 0 : i32
    %c0_i32_0 = arith.constant 0 : i32
    %c0_i32_1 = arith.constant 0 : i32
    return %c0_i32, %c0_i32_0 : i32, i32
  }
  func.func @transform_3(%arg0: i32) -> i32 {
    %c0_i32 = arith.constant 0 : i32
    %c0_i32_0 = arith.constant 0 : i32
    return %c0_i32 : i32
  }
  func.func @transform_4(%arg0: i32) -> (i32, i32) {
    %c0_i32 = arith.constant 0 : i32
    %c0_i32_0 = arith.constant 0 : i32
    %c0_i32_1 = arith.constant 0 : i32
    return %c0_i32, %c0_i32_0 : i32, i32
  }
  func.func @transform_5(%arg0: i32) -> (i32, i32) {
    %c0_i32 = arith.constant 0 : i32
    %c0_i32_0 = arith.constant 0 : i32
    %c0_i32_1 = arith.constant 0 : i32
    return %c0_i32, %c0_i32_0 : i32, i32
  }
  func.func @transform_6(%arg0: i32) -> i32 {
    %c0_i32 = arith.constant 0 : i32
    %c0_i32_0 = arith.constant 0 : i32
    return %c0_i32 : i32
  }
}

</mosaic_0001>

<llo_original>
// kernel: tpu_custom_call.1
$region0: #{tpu_custom_call.1}
  #allocation0 [shape = 'u32[]', space=smem, size = 0x4, offset = 0x4, fixed_abs, tag = 'smem constant byte address 0x4 - core index']
  #allocation1 [shape = 'u32[72,128]{1,0:T(1,128)}', space=vmem, size = 0x9000, scoped, tag = 'internal scratch']
  #allocation2 [shape = 'f32[1,128]{1,0:T(1,128)}', space=vmem, size = 0x200, scoped, tag = 'scratch operand']
  #allocation3 [shape = 'f32[1,128]{1,0:T(1,128)}', space=vmem, size = 0x200, scoped, tag = 'scratch operand']
  #allocation4 [shape = 'f32[1,128]{1,0:T(1,128)}', space=vmem, size = 0x200, scoped, tag = 'scratch operand']
  #allocation5 [shape = 'f32[1,128]{1,0:T(1,128)}', space=vmem, size = 0x200, scoped, tag = 'scratch operand']
  #allocation6 [shape = 'f32[1]{0:T(128)S(6)}', space=smem, size = 0x200, scoped, tag = 'scoped memory for tpu_custom_call.1']
  %s0 = inlined_call_operand.hbm [shape: f32[8,128], index: 0, kind: input, shape index: {}]
  %s1 = inlined_call_operand.hbm [shape: f32[8,128], index: 1, kind: input, shape index: {}]
  %s2 = inlined_call_operand.vmem [shape: f32[1,128], index: 2, kind: input, shape index: {}]
  %s3 = inlined_call_operand.<no memory space> [shape: f32[1], index: 3, kind: input, shape index: {}]
  %s4 = inlined_call_operand.hbm [shape: f32[8,128], index: 4, kind: output, shape index: {0}]
  %s5 = inlined_call_operand.hbm [shape: f32[1,128], index: 5, kind: output, shape index: {1}]
  %s6 = inlined_call_operand.hbm [shape: f32[1], index: 6, kind: output, shape index: {2}]
  %7 = xla_tuple %s4, %s5, %s6
  %s8 = sld [smem:[#allocation0]]
  $region62: #{tpu_custom_call.1} parent=0
    _
  %s10 = ssub.s32 1, %s8
  %s11 = scalar_select 0, %s10, %s8
  %12 = sst [smem:[#allocation6]] %s3
  $region1: #{tpu_custom_call.1} parent=0
    #allocation7 [shape = 'u8[4096]{0}', space=vmem, size = 0x1000, scoped, tag = 'input window, operand 0, single buffered']
    #allocation8 [shape = 's32[1]{0}', space=sflag, size = 0x4, scoped, tag = 'scoped memory for tpu_custom_call.1']
    #allocation9 [shape = 's32[1]{0}', space=sflag, size = 0x4, scoped, tag = 'scoped memory for tpu_custom_call.1']
    #allocation10 [shape = 's32[1]{0}', space=sflag, size = 0x4, scoped, tag = 'scoped memory for tpu_custom_call.1']
    #allocation11 [shape = 'u8[4096]{0}', space=vmem, size = 0x1000, scoped, tag = 'input window, operand 1, single buffered']
    #allocation12 [shape = 's32[1]{0}', space=sflag, size = 0x4, scoped, tag = 'scoped memory for tpu_custom_call.1']
    #allocation13 [shape = 'u8[4096]{0}', space=vmem, size = 0x1000, scoped, tag = 'output window, operand 0, single buffered']
    #allocation14 [shape = 'u8[512]{0}', space=vmem, size = 0x400, scoped, tag = 'output window, operand 1, single buffered']
    #allocation15 [shape = 's32[1]{0}', space=sflag, size = 0x4, scoped, tag = 'scoped memory for tpu_custom_call.1']
    #allocation16 [shape = 'u8[512]{0}', space=smem, size = 0x200, scoped, tag = 'output window, operand 2, single buffered']
    %13 = vsyncpa [#allocation8], 0
    %14 = vsyncpa [#allocation12], 0
    %15 = vsyncpa [#allocation9], 0
    %16 = vsyncpa [#allocation15], 0
    %17 = vsyncpa [#allocation10], 0
    // Predicated region
    $region2: #{tpu_custom_call.1} parent=1 // pred_check
      _
    $region3: #{tpu_custom_call.1} parent=1 // pred_check_branch
      %19 = sbr.rel (0) target = $region5
    $region4: #{tpu_custom_call.1} parent=1 // pred_region
      %s20 = ssub.s32 0, 0
      %22 = vsyncadd [#allocation8], 0
      %s23 = smul.addr %s20, 8
      %s24 = scalar_lea.hbm %s0, %s23
      %s26 = sshll.u32 %s24, 4
      %s27 = int_to_ptr.hbm [resolvable:$true] %s26
      %s28 = sshll.u32 [#allocation7], 4
      %s29 = int_to_ptr.vmem [resolvable:$true] %s28
      %31 = dma.hbm_to_vmem [thread:$0]  %s27, 128, %s29, [#allocation8]
    $region5: #{tpu_custom_call.1} parent=1 // pred_fallthru
      _
    // Predicated region
    $region6: #{tpu_custom_call.1} parent=1 // pred_check
      _
    $region7: #{tpu_custom_call.1} parent=1 // pred_check_branch
      %33 = sbr.rel (0) target = $region9
    $region8: #{tpu_custom_call.1} parent=1 // pred_region
      %s34 = ssub.s32 0, 0
      %36 = vsyncadd [#allocation12], 0
      %s37 = smul.addr %s34, 8
      %s38 = scalar_lea.hbm %s1, %s37
      %s40 = sshll.u32 %s38, 4
      %s41 = int_to_ptr.hbm [resolvable:$true] %s40
      %s42 = sshll.u32 [#allocation11], 4
      %s43 = int_to_ptr.vmem [resolvable:$true] %s42
      %45 = dma.hbm_to_vmem [thread:$0]  %s41, 128, %s43, [#allocation12]
    $region9: #{tpu_custom_call.1} parent=1 // pred_fallthru
      _
    // Predicated region
    $region10: #{tpu_custom_call.1} parent=1 // pred_check
      _
    $region11: #{tpu_custom_call.1} parent=1 // pred_check_branch
      %47 = sbr.rel (0) target = $region13
    $region12: #{tpu_custom_call.1} parent=1 // pred_region
      _
    $region13: #{tpu_custom_call.1} parent=1 // pred_fallthru
      _
    // Predicated region
    $region14: #{tpu_custom_call.1} parent=1 // pred_check
      _
    $region15: #{tpu_custom_call.1} parent=1 // pred_check_branch
      %49 = sbr.rel (0) target = $region17
    $region16: #{tpu_custom_call.1} parent=1 // pred_region
      _
    $region17: #{tpu_custom_call.1} parent=1 // pred_fallthru
      _
    // Predicated region
    $region18: #{tpu_custom_call.1} parent=1 // pred_check
      _
    $region19: #{tpu_custom_call.1} parent=1 // pred_check_branch
      %51 = sbr.rel (0) target = $region21
    $region20: #{tpu_custom_call.1} parent=1 // pred_region
      %53 = dma.done [#allocation8], 128
    $region21: #{tpu_custom_call.1} parent=1 // pred_fallthru
      _
    // Predicated region
    $region22: #{tpu_custom_call.1} parent=1 // pred_check
      _
    $region23: #{tpu_custom_call.1} parent=1 // pred_check_branch
      %55 = sbr.rel (0) target = $region25
    $region24: #{tpu_custom_call.1} parent=1 // pred_region
      %57 = dma.done [#allocation12], 128
    $region25: #{tpu_custom_call.1} parent=1 // pred_fallthru
      _
    %s58 = ssub.s32 0, 0
    %s59 = ssub.s32 0, 0
    %p60 = scmp.eq.s32.totalorder 0, 0
    // Predicated region
    $region26: #{tpu_custom_call.1} parent=1 // pred_check
      %p61 = pneg %p60
    $region27: #{tpu_custom_call.1} parent=1 // pred_check_branch
      %63 = sbr.rel (%p61) target = $region29
    $region28: #{tpu_custom_call.1} parent=1 // pred_region
      %v64 = vld [vmem:[%s2] sm:$0x1]
      %65 = vst [vmem:[#allocation2] sm:$0x1] %v64
      %66 = vst [vmem:[#allocation3] sm:$0x1] 0.0
      %67 = vst [vmem:[#allocation4] sm:$0x1] 0.0
    $region29: #{tpu_custom_call.1} parent=1 // pred_fallthru
      _
    %v68 = vld [vmem:[#allocation7] sm:$0xff]
    %v69 = vld [vmem:[#allocation11] sm:$0xff]
    %v70 = vsub.f32 1.0, %v69
    %v71 = vmul.f32 %v70, 0.99
    %v73 = vrot.slane %v71, 1
    %vm75 = vcmask 1046528
    %v76 = vsel %vm75, %v73, 1.0
    %v78 = vrot.slane %v68, 1
    %v80 = vsel %vm75, %v78, 0.0
    %v81 = vmul.f32 %v71, %v80
    %v82 = vadd.f32 %v68, %v81
    %v83 = vmul.f32 %v71, %v76
    %v85 = vrot.slane %v83, 2
    %vm87 = vcmask 1045504
    %v88 = vsel %vm87, %v85, 1.0
    %v90 = vrot.slane %v82, 2
    %v92 = vsel %vm87, %v90, 0.0
    %v93 = vmul.f32 %v83, %v92
    %v94 = vadd.f32 %v82, %v93
    %v95 = vmul.f32 %v83, %v88
    %v97 = vrot.slane %v95, 4
    %vm99 = vcmask 1043456
    %v100 = vsel %vm99, %v97, 1.0
    %v102 = vrot.slane %v94, 4
    %v104 = vsel %vm99, %v102, 0.0
    %v105 = vmul.f32 %v95, %v104
    %v106 = vadd.f32 %v94, %v105
    %v107 = vmul.f32 %v95, %v100
    %v108 = vld [vmem:[#allocation2] sm:$0x1]
    %v110 = vperm.slane %v108, 0
    %v112 = vmul.f32 %v107, %v110
    %v113 = vadd.f32 %v112, %v106
    %114 = vst [vmem:[#allocation2] sm:$0x1] %v113
    %115 = vst [vmem:[#allocation14] sm:$0x1] %v113
    // Predicated region
    $region30: #{tpu_custom_call.1} parent=1 // pred_check
      %p116 = pneg %p60
    $region31: #{tpu_custom_call.1} parent=1 // pred_check_branch
      %118 = sbr.rel (%p116) target = $region33
    $region32: #{tpu_custom_call.1} parent=1 // pred_region
      %v119 = vrot.slane %v113, 4
      %v120 = vadd.f32 %v113, %v119
      %v121 = vrot.slane %v120, 2
      %v122 = vadd.f32 %v120, %v121
      %v123 = vrot.slane %v122, 1
      %v124 = vadd.f32 %v122, %v123
      %v125 = vrcp.pop 8.0
      %v126 = vmul.f32 8.0, %v125
      %v127 = vsub.f32 1.0, %v126
      %v128 = vmul.f32 %v125, %v127
      %v129 = vadd.f32 %v125, %v128
      %vm130 = vweird.f32 %v125
      %v131 = vsel %vm130, %v125, %v129
      %v132 = vmul.f32 %v124, %v131
      %133 = vst [vmem:[#allocation5] sm:$0x1] %v132
    $region33: #{tpu_custom_call.1} parent=1 // pred_fallthru
      _
    %v134 = vld [vmem:[#allocation5] sm:$0x1]
    %v136 = vperm.slane %v134, 0
    %v138 = vsub.f32 %v113, %v136
    %v139 = vld [vmem:[#allocation3] sm:$0x1]
    %v140 = vrot.slane %v138, 4
    %v141 = vadd.f32 %v138, %v140
    %v142 = vrot.slane %v141, 2
    %v143 = vadd.f32 %v141, %v142
    %v144 = vrot.slane %v143, 1
    %v145 = vadd.f32 %v143, %v144
    %v146 = vadd.f32 %v139, %v145
    %147 = vst [vmem:[#allocation3] sm:$0x1] %v146
    %v148 = vld [vmem:[#allocation4] sm:$0x1]
    %v149 = vmul.f32 %v138, %v138
    %v150 = vrot.slane %v149, 4
    %v151 = vadd.f32 %v149, %v150
    %v152 = vrot.slane %v151, 2
    %v153 = vadd.f32 %v151, %v152
    %v154 = vrot.slane %v153, 1
    %v155 = vadd.f32 %v153, %v154
    %v156 = vadd.f32 %v148, %v155
    %157 = vst [vmem:[#allocation4] sm:$0x1] %v156
    %s158 = ssub.s32 0, 0
    %s159 = smul.u32 %s158, 8
    %v160 = vld [vmem:[#allocation7] sm:$0xff]
    %s161 = scalar_lea.vmem [#allocation13], %s159
    %162 = vst [vmem:[%s161] sm:$0xff] %v160
    // Predicated region
    $region34: #{tpu_custom_call.1} parent=1 // pred_check
      %p163 = pneg %p60
    $region35: #{tpu_custom_call.1} parent=1 // pred_check_branch
      %165 = sbr.rel (%p163) target = $region37
    $region36: #{tpu_custom_call.1} parent=1 // pred_region
      %v166 = vld [vmem:[#allocation3] sm:$0x1]
      %v167 = vld [vmem:[#allocation4] sm:$0x1]
      %v168 = vld [vmem:[#allocation5] sm:$0x1]
      %v169 = vrcp.pop 8.0
      %v170 = vmul.f32 8.0, %v169
      %v171 = vsub.f32 1.0, %v170
      %v172 = vmul.f32 %v169, %v171
      %v173 = vadd.f32 %v169, %v172
      %vm174 = vweird.f32 %v169
      %v175 = vsel %vm174, %v169, %v173
      %v176 = vmul.f32 %v166, %v175
      %v177 = vadd.f32 %v168, %v176
      %v178 = vmul.f32 %v166, %v166
      %v179 = vmul.f32 %v178, %v175
      %v180 = vsub.f32 %v167, %v179
      %vm181 = vcmask 1040384
      %v182 = vsel %vm181, %v177, 0.0
      %183 = vadd.xlane.f32.xlu0 %v182
      %v184 = vpop.xlane.xlu0 %183
      %v185 = vrot.slane %v184, 4
      %v186 = vadd.f32 %v184, %v185
      %v187 = vrot.slane %v186, 2
      %v188 = vadd.f32 %v186, %v187
      %v189 = vrot.slane %v188, 1
      %v190 = vadd.f32 %v188, %v189
      %s191 = vtos %v190
      %v192 = vrcp.pop 128.0
      %v193 = vmul.f32 128.0, %v192
      %v194 = vsub.f32 1.0, %v193
      %v195 = vmul.f32 %v192, %v194
      %v196 = vadd.f32 %v192, %v195
      %vm197 = vweird.f32 %v192
      %v198 = vsel %vm197, %v192, %v196
      %s199 = vtos %v198
      %s200 = smul.f32 %s191, %s199
      %v201 = vstv %s200
      %v202 = vsub.f32 %v177, %v201
      %v203 = vsel %vm181, %v180, 0.0
      %204 = vadd.xlane.f32.xlu0 %v203
      %v205 = vpop.xlane.xlu0 %204
      %v206 = vrot.slane %v205, 4
      %v207 = vadd.f32 %v205, %v206
      %v208 = vrot.slane %v207, 2
      %v209 = vadd.f32 %v207, %v208
      %v210 = vrot.slane %v209, 1
      %v211 = vadd.f32 %v209, %v210
      %s212 = vtos %v211
      %v213 = vmul.f32 %v202, %v202
      %v214 = vsel %vm181, %v213, 0.0
      %215 = vadd.xlane.f32.xlu0 %v214
      %v216 = vpop.xlane.xlu0 %215
      %v217 = vrot.slane %v216, 4
      %v218 = vadd.f32 %v216, %v217
      %v219 = vrot.slane %v218, 2
      %v220 = vadd.f32 %v218, %v219
      %v221 = vrot.slane %v220, 1
      %v222 = vadd.f32 %v220, %v221
      %s223 = vtos %v222
      %s224 = smul.f32 %s223, 8.0
      %s225 = sadd.f32 %s212, %s224
      %v226 = vrcp.pop 1023.0
      %v227 = vmul.f32 1023.0, %v226
      %v228 = vsub.f32 1.0, %v227
      %v229 = vmul.f32 %v226, %v228
      %v230 = vadd.f32 %v226, %v229
      %vm231 = vweird.f32 %v226
      %v232 = vsel %vm231, %v226, %v230
      %s233 = vtos %v232
      %s234 = smul.f32 %s225, %s233
      %s235 = sld [smem:[#allocation6]]
      %s236 = smul.f32 %s235, 0.99
      %s237 = smul.f32 %s234, 0.01
      %s238 = sadd.f32 %s236, %s237
      %s239 = scalar_lea.smem [#allocation16], 0
      %240 = sst [smem:[%s239]] %s238
      %s241 = sadd.f32 %s238, 1e-08
      %v242 = vstv %s241
      %v243 = vrsqrt.pop %v242
      %v244 = vmul.f32 %v243, %v242
      %v245 = vmul.f32 %v244, %v243
      %v246 = vmul.f32 0.5, %v245
      %v247 = vsub.f32 1.5, %v246
      %v248 = vmul.f32 %v243, %v247
      %vm249 = vweird.f32 %v242
      %vm250 = vweird.f32 %v243
      %vm251 = vmor %vm249, %vm250
      %v252 = vsel %vm251, %v243, %v248
      %s253 = vtos %v252
      %v254 = vld [vmem:[#allocation13] sm:$0xff]
      %v255 = vstv %s253
      %v256 = vmul.f32 %v254, %v255
      %v257 = vmax.f32 %v256, -10.0
      %v258 = vmin.f32 %v257, 10.0
      %259 = vst [vmem:[#allocation13] sm:$0xff] %v258
    $region37: #{tpu_custom_call.1} parent=1 // pred_fallthru
      _
    // Predicated region
    $region38: #{tpu_custom_call.1} parent=1 // pred_check
      _
    $region39: #{tpu_custom_call.1} parent=1 // pred_check_branch
      %261 = sbr.rel (0) target = $region41
    $region40: #{tpu_custom_call.1} parent=1 // pred_region
      %263 = vsyncadd [#allocation9], 0
      %s265 = sshll.u32 [#allocation13], 4
      %s266 = int_to_ptr.vmem [resolvable:$true] %s265
      %s267 = sshll.u32 %s4, 4
      %s268 = int_to_ptr.hbm [resolvable:$true] %s267
      %270 = dma.vmem_to_hbm [thread:$0]  %s266, 128, %s268, [#allocation9]
    $region41: #{tpu_custom_call.1} parent=1 // pred_fallthru
      _
    // Predicated region
    $region42: #{tpu_custom_call.1} parent=1 // pred_check
      _
    $region43: #{tpu_custom_call.1} parent=1 // pred_check_branch
      %272 = sbr.rel (0) target = $region45
    $region44: #{tpu_custom_call.1} parent=1 // pred_region
      %274 = vsyncadd [#allocation15], 0
      %s276 = sshll.u32 [#allocation14], 4
      %s277 = int_to_ptr.vmem [resolvable:$true] %s276
      %s278 = sshll.u32 %s5, 4
      %s279 = int_to_ptr.hbm [resolvable:$true] %s278
      %281 = dma.vmem_to_hbm [thread:$0]  %s277, 16, %s279, [#allocation15]
    $region45: #{tpu_custom_call.1} parent=1 // pred_fallthru
      _
    // Predicated region
    $region46: #{tpu_custom_call.1} parent=1 // pred_check
      _
    $region47: #{tpu_custom_call.1} parent=1 // pred_check_branch
      %283 = sbr.rel (0) target = $region49
    $region48: #{tpu_custom_call.1} parent=1 // pred_region
      %285 = vsyncadd [#allocation10], 0
      %s287 = sshll.u32 %s6, 4
      %s288 = int_to_ptr.hbm [resolvable:$true] %s287
      %290 = dma.smem_to_hbm [#allocation16], 16, %s288, [#allocation10]
    $region49: #{tpu_custom_call.1} parent=1 // pred_fallthru
      _
    // Predicated region
    $region50: #{tpu_custom_call.1} parent=1 // pred_check
      _
    $region51: #{tpu_custom_call.1} parent=1 // pred_check_branch
      %292 = sbr.rel (0) target = $region53
    $region52: #{tpu_custom_call.1} parent=1 // pred_region
      %294 = dma.done [#allocation9], 128
    $region53: #{tpu_custom_call.1} parent=1 // pred_fallthru
      _
    // Predicated region
    $region54: #{tpu_custom_call.1} parent=1 // pred_check
      _
    $region55: #{tpu_custom_call.1} parent=1 // pred_check_branch
      %296 = sbr.rel (0) target = $region57
    $region56: #{tpu_custom_call.1} parent=1 // pred_region
      %298 = dma.done [#allocation15], 16
    $region57: #{tpu_custom_call.1} parent=1 // pred_fallthru
      _
    // Predicated region
    $region58: #{tpu_custom_call.1} parent=1 // pred_check
      _
    $region59: #{tpu_custom_call.1} parent=1 // pred_check_branch
      %300 = sbr.rel (0) target = $region61
    $region60: #{tpu_custom_call.1} parent=1 // pred_region
      %302 = dma.done [#allocation10], 16
    $region61: #{tpu_custom_call.1} parent=1 // pred_fallthru
      _
    %303 = sfence
    %304 = vsyncpa [#allocation8], 1
    %305 = vsyncpa [#allocation12], 1
    %306 = vsyncpa [#allocation9], 1
    %307 = vsyncpa [#allocation15], 1
    %308 = vsyncpa [#allocation10], 1

</llo_original>
